<compile_context>
chip_gen: v5e
topology: v5e:2x2
jax: 0.10.0
libtpu: 0.0.40
codegen_flags: <defaults>
</compile_context>

<pallas_src>
import functools

import jax
import jax.numpy as jnp
from jax import lax
from jax.experimental import pallas as pl
from jax.experimental.pallas import tpu as pltpu

LN_EPS = 1e-5  # nn.LayerNorm default


# ----------------------------------------------------------------------------
# Pallas kernel: fused gcn_norm + encode (3 GCN layers, ReLU, LayerNorm x2)
# + decode (z @ z.T), single packed lane-dense output.
# ----------------------------------------------------------------------------
def _igae_kernel(a_ref, x_ref,
                 w1_ref, b1_ref, g1_ref, be1_ref,
                 w2_ref, b2_ref, g2_ref, be2_ref,
                 w3_ref, b3_ref,
                 out_ref,
                 *, reassoc):
    n = a_ref.shape[0]
    h3 = w3_ref.shape[-1]
    g = h3 // 2

    # --- fused symmetric GCN normalization (gcn_norm equivalent) ------------
    # deg[i] = sum_s A[i, s]  (A already contains the self loops).
    a_raw = a_ref[...]                                    # [N, N] f32 raw A + I
    deg = jnp.sum(a_raw, axis=1, keepdims=True)           # [N, 1] f32 (exact)
    dinv = jnp.where(deg > 0.0, lax.rsqrt(deg), 0.0)      # D^-1/2 (EUP rsqrt)
    A = a_raw.astype(jnp.bfloat16)                        # bf16 MXU operand

    x = x_ref[...]                                        # [N, F] bf16

    def agg(h):
        # A_hat @ h == D^-1/2 (A (D^-1/2 h)) : two cheap O(N*width) sublane
        # scalings + one bf16 MXU matmul with f32 accumulation.  A_hat itself
        # is never materialized (saves an O(N^2) elementwise pass).
        return dinv * jnp.dot(A, (dinv * h).astype(jnp.bfloat16),
                              preferred_element_type=jnp.float32)

    def mix(h, w_ref):
        # h @ W : bf16 MXU operands, f32 accumulation.
        return jnp.dot(h.astype(jnp.bfloat16), w_ref[...],
                       preferred_element_type=jnp.float32)

    def gcn(h, w_ref, b_ref, do_reassoc):
        # GCNConv: A_hat @ (h @ W) + b.  When in_dim < out_dim reassociate to
        # (A_hat @ h) @ W so the N x N matmul runs at the narrower width
        # (mathematically identical; only fp rounding differs).
        if do_reassoc:
            return mix(agg(h), w_ref) + b_ref[...]
        return agg(mix(h, w_ref)) + b_ref[...]

    def layernorm(h, gam_ref, bet_ref):
        m = jnp.mean(h, axis=-1, keepdims=True)
        c = h - m
        v = jnp.mean(c * c, axis=-1, keepdims=True)
        return c * lax.rsqrt(v + LN_EPS) * gam_ref[...] + bet_ref[...]

    # conv1 -> relu -> norm1 -> (dropout = identity in eval)
    h1 = layernorm(jnp.maximum(gcn(x, w1_ref, b1_ref, reassoc[0]), 0.0),
                   g1_ref, be1_ref)
    # conv2 -> relu -> norm2 -> (dropout = identity in eval)
    h2 = layernorm(jnp.maximum(gcn(h1, w2_ref, b2_ref, reassoc[1]), 0.0),
                   g2_ref, be2_ref)
    # conv_out
    enc = gcn(h2, w3_ref, b3_ref, reassoc[2])             # [N, 2g] == [mu|log_var]

    # decode: adjacency logits = z @ z.T (z == mu in eval mode).  bf16 operands
    # (f32xf32 MXU is emulated and 3-6x slower), f32 accumulation, and the
    # feature axis of mu is contracted against itself so no transpose of mu is
    # materialized.
    mu_b = enc[:, :g].astype(jnp.bfloat16)
    adj = lax.dot_general(mu_b, mu_b,
                          dimension_numbers=(((1,), (1,)), ((), ())),
                          preferred_element_type=jnp.float32)  # [N, N]

    # Single lane-dense store: [ adj | mu | log_var | 0-pad ] in one full-width
    # (multiple-of-128) unmasked vst; the wrapper slices the pieces back out.
    w_out = out_ref.shape[-1]
    pieces = [adj, enc]
    pad = w_out - n - h3
    if pad:
        pieces.append(jnp.zeros((n, pad), jnp.float32))
    out_ref[...] = jnp.concatenate(pieces, axis=-1)


# ----------------------------------------------------------------------------
# Wrapper: O(E) adjacency scatter, pallas_call, output slab slicing.
# ----------------------------------------------------------------------------
def interaction_graph_autoencoder(x, edge_index, edge_weight, params):
    """Forward pass. x: [N, F] float32, edge_index: [2, E] int32,
    edge_weight: [E] float32 or None.  Returns (adj_rec_logits, mu, log_var, z)."""
    n, f = x.shape
    h1 = params["W1"].shape[1]
    h2 = params["W2"].shape[1]
    h3 = params["W3"].shape[1]
    g = h3 // 2

    # --- O(E + N) adjacency scatter, self-loops folded in -------------------
    # A[d, s] = sum_e w_e for edges s->d, plus 1.0 on the diagonal
    # (add_self_loops with fill_value=1.0, exactly gcn_norm's behaviour).
    e = edge_index.shape[1]
    w = (jnp.ones((e,), jnp.float32) if edge_weight is None
         else edge_weight.astype(jnp.float32))
    diag = jnp.arange(n, dtype=edge_index.dtype)
    rows = jnp.concatenate([edge_index[1], diag])
    cols = jnp.concatenate([edge_index[0], diag])
    vals = jnp.concatenate([w, jnp.ones((n,), jnp.float32)])
    A = (jnp.zeros((n * n,), jnp.float32)
         .at[rows * n + cols].add(vals)
         .reshape(n, n))                                   # raw A + I (f32)

    # Reassociate any layer whose input width is smaller than its output width.
    reassoc = (f < h1, h1 < h2, h2 < h3)

    # Packed lane-dense output slab: [ adj (N) | mu|log_var (h3) | 0-pad ].
    w_out = ((n + h3 + 127) // 128) * 128

    vmem = pl.BlockSpec(memory_space=pltpu.MemorySpace.VMEM)
    out_shape = jax.ShapeDtypeStruct((n, w_out), jnp.float32)

    inputs = (
        A, x.astype(jnp.bfloat16),
        params["W1"].astype(jnp.bfloat16), params["b1"],
        params["gamma1"], params["beta1"],
        params["W2"].astype(jnp.bfloat16), params["b2"],
        params["gamma2"], params["beta2"],
        params["W3"].astype(jnp.bfloat16), params["b3"],
    )

    # --- VMEM budget (capped below physical VMEM) + cost estimate -----------
    io_bytes = (4 * n * n                               # raw A (f32)
                + 2 * n * f                             # x (bf16)
                + 2 * (f * h1 + h1 * h2 + h2 * h3)      # weights (bf16)
                + 4 * (3 * h1 + 3 * h2 + h3)            # biases + LN params
                + 4 * n * w_out)                        # packed output slab
    act_bytes = 4 * n * (h1 + h2 + h3) * 2 + 2 * n * n  # resident activations (rough)
    try:
        vmem_cap = int(getattr(pltpu.get_tpu_info(), "vmem_capacity_bytes",
                               64 * 1024 * 1024))
    except Exception:  # pragma: no cover - conservative fallback
        vmem_cap = 64 * 1024 * 1024
    vmem_limit = int(min(int(0.85 * vmem_cap),                 # headroom on v7x
                         max(32 * 1024 * 1024, 2 * (io_bytes + act_bytes))))

    def _gcn_flops(din, dout):
        a_width = min(din, dout)                        # reassociation rule
        return 2 * n * n * a_width + 2 * n * din * dout

    flops = (_gcn_flops(f, h1) + _gcn_flops(h1, h2) + _gcn_flops(h2, h3)
             + 2 * n * n * g)                           # decode z @ z.T
    cost = pl.CostEstimate(flops=flops, transcendentals=3 * n,
                           bytes_accessed=io_bytes)

    slab = pl.pallas_call(
        functools.partial(_igae_kernel, reassoc=reassoc),
        out_shape=out_shape,
        in_specs=[vmem] * len(inputs),
        out_specs=vmem,
        compiler_params=pltpu.CompilerParams(vmem_limit_bytes=vmem_limit),
        cost_estimate=cost,
    )(*inputs)

    adj = slab[:, :n]
    mu = slab[:, n:n + g]
    log_var = slab[:, n + g:n + h3]
    z_gene = mu                                         # eval-mode reparameterize
    return adj, mu, log_var, z_gene


# ----------------------------------------------------------------------------
# Parameter init (matches the PyTorch module's layer sizes).
# ----------------------------------------------------------------------------
def init_params(key, feature_dim, gene_embedding_dim):
    h1 = gene_embedding_dim * 4
    h2 = gene_embedding_dim * 2
    h3 = gene_embedding_dim * 2
    ks = jax.random.split(key, 3)

    def glorot(k, fan_in, fan_out):
        lim = jnp.sqrt(6.0 / (fan_in + fan_out))
        return jax.random.uniform(k, (fan_in, fan_out), jnp.float32, -lim, lim)

    # biases / LayerNorm params kept 2-D (1, dim) for clean lane broadcasting.
    return {
        "W1": glorot(ks[0], feature_dim, h1), "b1": jnp.zeros((1, h1), jnp.float32),
        "gamma1": jnp.ones((1, h1), jnp.float32), "beta1": jnp.zeros((1, h1), jnp.float32),
        "W2": glorot(ks[1], h1, h2), "b2": jnp.zeros((1, h2), jnp.float32),
        "gamma2": jnp.ones((1, h2), jnp.float32), "beta2": jnp.zeros((1, h2), jnp.float32),
        "W3": glorot(ks[2], h2, h3), "b3": jnp.zeros((1, h3), jnp.float32),
    }


# ----------------------------------------------------------------------------
# Pure-JAX f32 reference of the PyTorch forward (eval mode) for validation.
# ----------------------------------------------------------------------------
def _reference_forward(x, edge_index, edge_weight, params):
    n = x.shape[0]
    src, dst = edge_index[0], edge_index[1]
    A = jnp.zeros((n, n), jnp.float32).at[dst, src].add(edge_weight)
    A = A + jnp.eye(n, dtype=jnp.float32)
    deg = A.sum(axis=1)
    dinv = jnp.where(deg > 0.0, 1.0 / jnp.sqrt(deg), 0.0)
    A_hat = dinv[:, None] * A * dinv[None, :]

    def gcn(h, W, b):
        return A_hat @ (h @ W) + b

    def ln(h, gamma, beta):
        m = h.mean(-1, keepdims=True)
        v = ((h - m) ** 2).mean(-1, keepdims=True)
        return (h - m) / jnp.sqrt(v + LN_EPS) * gamma + beta

    h1 = ln(jax.nn.relu(gcn(x, params["W1"], params["b1"])),
            params["gamma1"], params["beta1"])
    h2 = ln(jax.nn.relu(gcn(h1, params["W2"], params["b2"])),
            params["gamma2"], params["beta2"])
    out = gcn(h2, params["W3"], params["b3"])
    g = out.shape[1] // 2
    mu, lv = out[:, :g], out[:, g:]
    return mu @ mu.T, mu, lv, mu


if __name__ == "__main__":
    key = jax.random.PRNGKey(0)
    k_x, k_p, k_w = jax.random.split(key, 3)

    N = 64                 # number of nodes (genes)
    FEATURE_DIM = 32
    GENE_EMB_DIM = 16

    x = jax.random.normal(k_x, (N, FEATURE_DIM), jnp.float32)

    # simple deterministic ring graph, both directions (undirected)
    idx = jnp.arange(N, dtype=jnp.int32)
    src = jnp.concatenate([idx, (idx + 1) % N])
    dst = jnp.concatenate([(idx + 1) % N, idx])
    edge_index = jnp.stack([src, dst], axis=0)
    edge_weight = jax.random.uniform(k_w, (edge_index.shape[1],), jnp.float32, 0.5, 1.5)

    params = init_params(k_p, FEATURE_DIM, GENE_EMB_DIM)

    adj_rec, mu, log_var, z_gene = interaction_graph_autoencoder(
        x, edge_index, edge_weight, params)
    jax.block_until_ready((adj_rec, mu, log_var, z_gene))

    assert adj_rec.shape == (N, N)
    assert mu.shape == (N, GENE_EMB_DIM)
    assert log_var.shape == (N, GENE_EMB_DIM)
    assert z_gene.shape == (N, GENE_EMB_DIM)

    # Loose-tolerance check vs. the f32 reference (kernel uses bf16 MXU operands
    # with f32 accumulation, so small rounding differences are expected).
    ref_adj, ref_mu, ref_lv, _ = _reference_forward(x, edge_index, edge_weight, params)
    assert bool(jnp.all(jnp.isfinite(adj_rec)))
    assert bool(jnp.allclose(mu, ref_mu, rtol=0.1, atol=0.25))
    assert bool(jnp.allclose(log_var, ref_lv, rtol=0.1, atol=0.25))
    assert bool(jnp.allclose(adj_rec, ref_adj, rtol=0.1, atol=0.5))

    print("KERNEL_OK")
</pallas_src>

<mosaic_0001>
module attributes {stable_mosaic.version = 11 : i64} {
  func.func @_igae_kernel(%arg0: memref<64x64xf32, #tpu.memory_space<vmem>>, %arg1: memref<64x32xbf16, #tpu.memory_space<vmem>>, %arg2: memref<32x64xbf16, #tpu.memory_space<vmem>>, %arg3: memref<1x64xf32, #tpu.memory_space<vmem>>, %arg4: memref<1x64xf32, #tpu.memory_space<vmem>>, %arg5: memref<1x64xf32, #tpu.memory_space<vmem>>, %arg6: memref<64x32xbf16, #tpu.memory_space<vmem>>, %arg7: memref<1x32xf32, #tpu.memory_space<vmem>>, %arg8: memref<1x32xf32, #tpu.memory_space<vmem>>, %arg9: memref<1x32xf32, #tpu.memory_space<vmem>>, %arg10: memref<32x32xbf16, #tpu.memory_space<vmem>>, %arg11: memref<1x32xf32, #tpu.memory_space<vmem>>, %arg12: memref<64x128xf32, #tpu.memory_space<vmem>>) attributes {dimension_semantics = [], scalar_prefetch = 0 : i64, scratch_operands = 0 : i64, tpu.core_type = #tpu.core_type<tc>} {
    %c0 = arith.constant 0 : index
    %c0_0 = arith.constant 0 : index
    %0 = vector.load %arg0[%c0, %c0_0] : memref<64x64xf32, #tpu.memory_space<vmem>>, vector<64x64xf32>
    %cst = arith.constant dense<0.000000e+00> : vector<64xf32>
    %1 = vector.multi_reduction <add>, %0, %cst [1] : vector<64x64xf32> to vector<64xf32>
    %2 = vector.shape_cast %1 : vector<64xf32> to vector<64x1xf32>
    %cst_1 = arith.constant 0.000000e+00 : f32
    %3 = vector.broadcast %cst_1 : f32 to vector<64x1xf32>
    %4 = arith.cmpf ogt, %2, %3 : vector<64x1xf32>
    %5 = math.rsqrt %2 : vector<64x1xf32>
    %cst_2 = arith.constant 0.000000e+00 : f32
    %6 = vector.broadcast %cst_2 : f32 to vector<64x1xf32>
    %7 = arith.select %4, %5, %6 : vector<64x1xi1>, vector<64x1xf32>
    %8 = arith.truncf %0 : vector<64x64xf32> to vector<64x64xbf16>
    %c0_3 = arith.constant 0 : index
    %c0_4 = arith.constant 0 : index
    %9 = vector.load %arg1[%c0_3, %c0_4] : memref<64x32xbf16, #tpu.memory_space<vmem>>, vector<64x32xbf16>
    %10 = arith.extf %9 : vector<64x32xbf16> to vector<64x32xf32>
    %11 = vector.broadcast %7 : vector<64x1xf32> to vector<64x32xf32>
    %12 = arith.mulf %11, %10 : vector<64x32xf32>
    %13 = arith.truncf %12 : vector<64x32xf32> to vector<64x32xbf16>
    %cst_5 = arith.constant dense<0.000000e+00> : vector<64x32xf32>
    %14 = tpu.matmul %8, %13, %cst_5 {dimension_numbers = #tpu.dot_dimension_numbers<[1], [0], [0], [1], [0, 0, 1, 1], [], []>} : vector<64x64xbf16>, vector<64x32xbf16>, vector<64x32xf32> -> vector<64x32xf32>
    %15 = vector.broadcast %7 : vector<64x1xf32> to vector<64x32xf32>
    %16 = arith.mulf %15, %14 : vector<64x32xf32>
    %17 = arith.truncf %16 : vector<64x32xf32> to vector<64x32xbf16>
    %c0_6 = arith.constant 0 : index
    %c0_7 = arith.constant 0 : index
    %18 = vector.load %arg2[%c0_6, %c0_7] : memref<32x64xbf16, #tpu.memory_space<vmem>>, vector<32x64xbf16>
    %cst_8 = arith.constant dense<0.000000e+00> : vector<64x64xf32>
    %19 = tpu.matmul %17, %18, %cst_8 {dimension_numbers = #tpu.dot_dimension_numbers<[1], [0], [0], [1], [0, 0, 1, 1], [], []>} : vector<64x32xbf16>, vector<32x64xbf16>, vector<64x64xf32> -> vector<64x64xf32>
    %c0_9 = arith.constant 0 : index
    %c0_10 = arith.constant 0 : index
    %20 = vector.load %arg3[%c0_9, %c0_10] : memref<1x64xf32, #tpu.memory_space<vmem>>, vector<1x64xf32>
    %21 = vector.broadcast %20 : vector<1x64xf32> to vector<64x64xf32>
    %22 = arith.addf %19, %21 : vector<64x64xf32>
    %cst_11 = arith.constant 0.000000e+00 : f32
    %23 = vector.broadcast %cst_11 : f32 to vector<64x64xf32>
    %24 = arith.maximumf %22, %23 : vector<64x64xf32>
    %cst_12 = arith.constant dense<0.000000e+00> : vector<64xf32>
    %25 = vector.multi_reduction <add>, %24, %cst_12 [1] : vector<64x64xf32> to vector<64xf32>
    %26 = vector.shape_cast %25 : vector<64xf32> to vector<64x1xf32>
    %cst_13 = arith.constant 6.400000e+01 : f32
    %27 = vector.broadcast %cst_13 : f32 to vector<64x1xf32>
    %28 = arith.divf %26, %27 : vector<64x1xf32>
    %29 = vector.broadcast %28 : vector<64x1xf32> to vector<64x64xf32>
    %30 = arith.subf %24, %29 : vector<64x64xf32>
    %31 = arith.mulf %30, %30 : vector<64x64xf32>
    %cst_14 = arith.constant dense<0.000000e+00> : vector<64xf32>
    %32 = vector.multi_reduction <add>, %31, %cst_14 [1] : vector<64x64xf32> to vector<64xf32>
    %33 = vector.shape_cast %32 : vector<64xf32> to vector<64x1xf32>
    %cst_15 = arith.constant 6.400000e+01 : f32
    %34 = vector.broadcast %cst_15 : f32 to vector<64x1xf32>
    %35 = arith.divf %33, %34 : vector<64x1xf32>
    %cst_16 = arith.constant 9.99999974E-6 : f32
    %36 = vector.broadcast %cst_16 : f32 to vector<64x1xf32>
    %37 = arith.addf %35, %36 : vector<64x1xf32>
    %38 = math.rsqrt %37 : vector<64x1xf32>
    %39 = vector.broadcast %38 : vector<64x1xf32> to vector<64x64xf32>
    %40 = arith.mulf %30, %39 : vector<64x64xf32>
    %c0_17 = arith.constant 0 : index
    %c0_18 = arith.constant 0 : index
    %41 = vector.load %arg4[%c0_17, %c0_18] : memref<1x64xf32, #tpu.memory_space<vmem>>, vector<1x64xf32>
    %42 = vector.broadcast %41 : vector<1x64xf32> to vector<64x64xf32>
    %43 = arith.mulf %40, %42 : vector<64x64xf32>
    %c0_19 = arith.constant 0 : index
    %c0_20 = arith.constant 0 : index
    %44 = vector.load %arg5[%c0_19, %c0_20] : memref<1x64xf32, #tpu.memory_space<vmem>>, vector<1x64xf32>
    %45 = vector.broadcast %44 : vector<1x64xf32> to vector<64x64xf32>
    %46 = arith.addf %43, %45 : vector<64x64xf32>
    %47 = arith.truncf %46 : vector<64x64xf32> to vector<64x64xbf16>
    %c0_21 = arith.constant 0 : index
    %c0_22 = arith.constant 0 : index
    %48 = vector.load %arg6[%c0_21, %c0_22] : memref<64x32xbf16, #tpu.memory_space<vmem>>, vector<64x32xbf16>
    %cst_23 = arith.constant dense<0.000000e+00> : vector<64x32xf32>
    %49 = tpu.matmul %47, %48, %cst_23 {dimension_numbers = #tpu.dot_dimension_numbers<[1], [0], [0], [1], [0, 0, 1, 1], [], []>} : vector<64x64xbf16>, vector<64x32xbf16>, vector<64x32xf32> -> vector<64x32xf32>
    %50 = vector.broadcast %7 : vector<64x1xf32> to vector<64x32xf32>
    %51 = arith.mulf %50, %49 : vector<64x32xf32>
    %52 = arith.truncf %51 : vector<64x32xf32> to vector<64x32xbf16>
    %cst_24 = arith.constant dense<0.000000e+00> : vector<64x32xf32>
    %53 = tpu.matmul %8, %52, %cst_24 {dimension_numbers = #tpu.dot_dimension_numbers<[1], [0], [0], [1], [0, 0, 1, 1], [], []>} : vector<64x64xbf16>, vector<64x32xbf16>, vector<64x32xf32> -> vector<64x32xf32>
    %54 = vector.broadcast %7 : vector<64x1xf32> to vector<64x32xf32>
    %55 = arith.mulf %54, %53 : vector<64x32xf32>
    %c0_25 = arith.constant 0 : index
    %c0_26 = arith.constant 0 : index
    %56 = vector.load %arg7[%c0_25, %c0_26] : memref<1x32xf32, #tpu.memory_space<vmem>>, vector<1x32xf32>
    %57 = vector.broadcast %56 : vector<1x32xf32> to vector<64x32xf32>
    %58 = arith.addf %55, %57 : vector<64x32xf32>
    %cst_27 = arith.constant 0.000000e+00 : f32
    %59 = vector.broadcast %cst_27 : f32 to vector<64x32xf32>
    %60 = arith.maximumf %58, %59 : vector<64x32xf32>
    %cst_28 = arith.constant dense<0.000000e+00> : vector<64xf32>
    %61 = vector.multi_reduction <add>, %60, %cst_28 [1] : vector<64x32xf32> to vector<64xf32>
    %62 = vector.shape_cast %61 : vector<64xf32> to vector<64x1xf32>
    %cst_29 = arith.constant 3.200000e+01 : f32
    %63 = vector.broadcast %cst_29 : f32 to vector<64x1xf32>
    %64 = arith.divf %62, %63 : vector<64x1xf32>
    %65 = vector.broadcast %64 : vector<64x1xf32> to vector<64x32xf32>
    %66 = arith.subf %60, %65 : vector<64x32xf32>
    %67 = arith.mulf %66, %66 : vector<64x32xf32>
    %cst_30 = arith.constant dense<0.000000e+00> : vector<64xf32>
    %68 = vector.multi_reduction <add>, %67, %cst_30 [1] : vector<64x32xf32> to vector<64xf32>
    %69 = vector.shape_cast %68 : vector<64xf32> to vector<64x1xf32>
    %cst_31 = arith.constant 3.200000e+01 : f32
    %70 = vector.broadcast %cst_31 : f32 to vector<64x1xf32>
    %71 = arith.divf %69, %70 : vector<64x1xf32>
    %cst_32 = arith.constant 9.99999974E-6 : f32
    %72 = vector.broadcast %cst_32 : f32 to vector<64x1xf32>
    %73 = arith.addf %71, %72 : vector<64x1xf32>
    %74 = math.rsqrt %73 : vector<64x1xf32>
    %75 = vector.broadcast %74 : vector<64x1xf32> to vector<64x32xf32>
    %76 = arith.mulf %66, %75 : vector<64x32xf32>
    %c0_33 = arith.constant 0 : index
    %c0_34 = arith.constant 0 : index
    %77 = vector.load %arg8[%c0_33, %c0_34] : memref<1x32xf32, #tpu.memory_space<vmem>>, vector<1x32xf32>
    %78 = vector.broadcast %77 : vector<1x32xf32> to vector<64x32xf32>
    %79 = arith.mulf %76, %78 : vector<64x32xf32>
    %c0_35 = arith.constant 0 : index
    %c0_36 = arith.constant 0 : index
    %80 = vector.load %arg9[%c0_35, %c0_36] : memref<1x32xf32, #tpu.memory_space<vmem>>, vector<1x32xf32>
    %81 = vector.broadcast %80 : vector<1x32xf32> to vector<64x32xf32>
    %82 = arith.addf %79, %81 : vector<64x32xf32>
    %83 = arith.truncf %82 : vector<64x32xf32> to vector<64x32xbf16>
    %c0_37 = arith.constant 0 : index
    %c0_38 = arith.constant 0 : index
    %84 = vector.load %arg10[%c0_37, %c0_38] : memref<32x32xbf16, #tpu.memory_space<vmem>>, vector<32x32xbf16>
    %cst_39 = arith.constant dense<0.000000e+00> : vector<64x32xf32>
    %85 = tpu.matmul %83, %84, %cst_39 {dimension_numbers = #tpu.dot_dimension_numbers<[1], [0], [0], [1], [0, 0, 1, 1], [], []>} : vector<64x32xbf16>, vector<32x32xbf16>, vector<64x32xf32> -> vector<64x32xf32>
    %86 = vector.broadcast %7 : vector<64x1xf32> to vector<64x32xf32>
    %87 = arith.mulf %86, %85 : vector<64x32xf32>
    %88 = arith.truncf %87 : vector<64x32xf32> to vector<64x32xbf16>
    %cst_40 = arith.constant dense<0.000000e+00> : vector<64x32xf32>
    %89 = tpu.matmul %8, %88, %cst_40 {dimension_numbers = #tpu.dot_dimension_numbers<[1], [0], [0], [1], [0, 0, 1, 1], [], []>} : vector<64x64xbf16>, vector<64x32xbf16>, vector<64x32xf32> -> vector<64x32xf32>
    %90 = vector.broadcast %7 : vector<64x1xf32> to vector<64x32xf32>
    %91 = arith.mulf %90, %89 : vector<64x32xf32>
    %c0_41 = arith.constant 0 : index
    %c0_42 = arith.constant 0 : index
    %92 = vector.load %arg11[%c0_41, %c0_42] : memref<1x32xf32, #tpu.memory_space<vmem>>, vector<1x32xf32>
    %93 = vector.broadcast %92 : vector<1x32xf32> to vector<64x32xf32>
    %94 = arith.addf %91, %93 : vector<64x32xf32>
    %95 = vector.extract_strided_slice %94 {offsets = [0, 0], sizes = [64, 16], strides = [1, 1]} : vector<64x32xf32> to vector<64x16xf32>
    %96 = arith.truncf %95 : vector<64x16xf32> to vector<64x16xbf16>
    %cst_43 = arith.constant dense<0.000000e+00> : vector<64x64xf32>
    %97 = tpu.matmul %96, %96, %cst_43 {dimension_numbers = #tpu.dot_dimension_numbers<[1], [1], [0], [0], [0, 0, 1, 0], [], []>} : vector<64x16xbf16>, vector<64x16xbf16>, vector<64x64xf32> -> vector<64x64xf32>
    %cst_44 = arith.constant 0.000000e+00 : f32
    %98 = vector.broadcast %cst_44 : f32 to vector<64x32xf32>
    %99 = tpu.concatenate %97, %94, %98 in 1 : vector<64x64xf32>, vector<64x32xf32>, vector<64x32xf32> -> vector<64x128xf32>
    %c0_45 = arith.constant 0 : index
    %c0_46 = arith.constant 0 : index
    %100 = vector.load %arg12[%c0_45, %c0_46] : memref<64x128xf32, #tpu.memory_space<vmem>>, vector<64x128xf32>
    tpu.vector_store %arg12[%c0_45, %c0_46], %99 {strides = array<i32>} : memref<64x128xf32, #tpu.memory_space<vmem>>, vector<64x128xf32>,
    return
  }
}

</mosaic_0001>

<llo_original>
// kernel: tpu_custom_call.1
$region0: #{tpu_custom_call.1}
  #allocation0 [shape = 'u32[]', space=smem, size = 0x4, offset = 0x4, fixed_abs, tag = 'smem constant byte address 0x4 - core index']
  #allocation1 [shape = 'u32[72,128]{1,0:T(1,128)}', space=vmem, size = 0x9000, scoped, tag = 'internal scratch']
  %s0 = inlined_call_operand.vmem [shape: f32[64,64], index: 0, kind: input, shape index: {}]
  %s1 = inlined_call_operand.vmem [shape: bf16[64,32], index: 1, kind: input, shape index: {}]
  %s2 = inlined_call_operand.vmem [shape: bf16[32,64], index: 2, kind: input, shape index: {}]
  %s3 = inlined_call_operand.vmem [shape: f32[1,64], index: 3, kind: input, shape index: {}]
  %s4 = inlined_call_operand.vmem [shape: f32[1,64], index: 4, kind: input, shape index: {}]
  %s5 = inlined_call_operand.vmem [shape: f32[1,64], index: 5, kind: input, shape index: {}]
  %s6 = inlined_call_operand.vmem [shape: bf16[64,32], index: 6, kind: input, shape index: {}]
  %s7 = inlined_call_operand.vmem [shape: f32[1,32], index: 7, kind: input, shape index: {}]
  %s8 = inlined_call_operand.vmem [shape: f32[1,32], index: 8, kind: input, shape index: {}]
  %s9 = inlined_call_operand.vmem [shape: f32[1,32], index: 9, kind: input, shape index: {}]
  %s10 = inlined_call_operand.vmem [shape: bf16[32,32], index: 10, kind: input, shape index: {}]
  %s11 = inlined_call_operand.vmem [shape: f32[1,32], index: 11, kind: input, shape index: {}]
  %s12 = inlined_call_operand.hbm [shape: f32[64,128], index: 12, kind: output, shape index: {}]
  %s13 = sld [smem:[#allocation0]]
  $region58: #{tpu_custom_call.1} parent=0
    _
  %s15 = ssub.s32 1, %s13
  %s16 = scalar_select 0, %s15, %s13
  $region1: #{tpu_custom_call.1} parent=0
    #allocation2 [shape = 'u8[32768]{0}', space=vmem, size = 0x8000, scoped, tag = 'output window, operand 0, single buffered']
    #allocation3 [shape = 's32[1]{0}', space=sflag, size = 0x4, scoped, tag = 'scoped memory for tpu_custom_call.1']
    %17 = vsyncpa [#allocation3], 0
    // Predicated region
    $region2: #{tpu_custom_call.1} parent=1 // pred_check
      _
    $region3: #{tpu_custom_call.1} parent=1 // pred_check_branch
      %19 = sbr.rel (0) target = $region5
    $region4: #{tpu_custom_call.1} parent=1 // pred_region
      _
    $region5: #{tpu_custom_call.1} parent=1 // pred_fallthru
      _
    // Predicated region
    $region6: #{tpu_custom_call.1} parent=1 // pred_check
      _
    $region7: #{tpu_custom_call.1} parent=1 // pred_check_branch
      %21 = sbr.rel (0) target = $region9
    $region8: #{tpu_custom_call.1} parent=1 // pred_region
      _
    $region9: #{tpu_custom_call.1} parent=1 // pred_fallthru
      _
    // Predicated region
    $region10: #{tpu_custom_call.1} parent=1 // pred_check
      _
    $region11: #{tpu_custom_call.1} parent=1 // pred_check_branch
      %23 = sbr.rel (0) target = $region13
    $region12: #{tpu_custom_call.1} parent=1 // pred_region
      _
    $region13: #{tpu_custom_call.1} parent=1 // pred_fallthru
      _
    // Predicated region
    $region14: #{tpu_custom_call.1} parent=1 // pred_check
      _
    $region15: #{tpu_custom_call.1} parent=1 // pred_check_branch
      %25 = sbr.rel (0) target = $region17
    $region16: #{tpu_custom_call.1} parent=1 // pred_region
      _
    $region17: #{tpu_custom_call.1} parent=1 // pred_fallthru
      _
    // Predicated region
    $region18: #{tpu_custom_call.1} parent=1 // pred_check
      _
    $region19: #{tpu_custom_call.1} parent=1 // pred_check_branch
      %27 = sbr.rel (0) target = $region21
    $region20: #{tpu_custom_call.1} parent=1 // pred_region
      _
    $region21: #{tpu_custom_call.1} parent=1 // pred_fallthru
      _
    // Predicated region
    $region22: #{tpu_custom_call.1} parent=1 // pred_check
      _
    $region23: #{tpu_custom_call.1} parent=1 // pred_check_branch
      %29 = sbr.rel (0) target = $region25
    $region24: #{tpu_custom_call.1} parent=1 // pred_region
      _
    $region25: #{tpu_custom_call.1} parent=1 // pred_fallthru
      _
    // Predicated region
    $region26: #{tpu_custom_call.1} parent=1 // pred_check
      _
    $region27: #{tpu_custom_call.1} parent=1 // pred_check_branch
      %31 = sbr.rel (0) target = $region29
    $region28: #{tpu_custom_call.1} parent=1 // pred_region
      _
    $region29: #{tpu_custom_call.1} parent=1 // pred_fallthru
      _
    // Predicated region
    $region30: #{tpu_custom_call.1} parent=1 // pred_check
      _
    $region31: #{tpu_custom_call.1} parent=1 // pred_check_branch
      %33 = sbr.rel (0) target = $region33
    $region32: #{tpu_custom_call.1} parent=1 // pred_region
      _
    $region33: #{tpu_custom_call.1} parent=1 // pred_fallthru
      _
    // Predicated region
    $region34: #{tpu_custom_call.1} parent=1 // pred_check
      _
    $region35: #{tpu_custom_call.1} parent=1 // pred_check_branch
      %35 = sbr.rel (0) target = $region37
    $region36: #{tpu_custom_call.1} parent=1 // pred_region
      _
    $region37: #{tpu_custom_call.1} parent=1 // pred_fallthru
      _
    // Predicated region
    $region38: #{tpu_custom_call.1} parent=1 // pred_check
      _
    $region39: #{tpu_custom_call.1} parent=1 // pred_check_branch
      %37 = sbr.rel (0) target = $region41
    $region40: #{tpu_custom_call.1} parent=1 // pred_region
      _
    $region41: #{tpu_custom_call.1} parent=1 // pred_fallthru
      _
    // Predicated region
    $region42: #{tpu_custom_call.1} parent=1 // pred_check
      _
    $region43: #{tpu_custom_call.1} parent=1 // pred_check_branch
      %39 = sbr.rel (0) target = $region45
    $region44: #{tpu_custom_call.1} parent=1 // pred_region
      _
    $region45: #{tpu_custom_call.1} parent=1 // pred_fallthru
      _
    // Predicated region
    $region46: #{tpu_custom_call.1} parent=1 // pred_check
      _
    $region47: #{tpu_custom_call.1} parent=1 // pred_check_branch
      %41 = sbr.rel (0) target = $region49
    $region48: #{tpu_custom_call.1} parent=1 // pred_region
      _
    $region49: #{tpu_custom_call.1} parent=1 // pred_fallthru
      _
    %v43 = vld [vmem:[%s0] sm:$0xff]
    %v44 = vld [vmem:[%s0 + $0x8] sm:$0xff]
    %v45 = vld [vmem:[%s0 + $0x10] sm:$0xff]
    %v46 = vld [vmem:[%s0 + $0x18] sm:$0xff]
    %v47 = vld [vmem:[%s0 + $0x20] sm:$0xff]
    %v48 = vld [vmem:[%s0 + $0x28] sm:$0xff]
    %v49 = vld [vmem:[%s0 + $0x30] sm:$0xff]
    %v50 = vld [vmem:[%s0 + $0x38] sm:$0xff]
    %vm51 = vcmask 523264
    %v52 = vsel %vm51, %v43, 0.0
    %53 = vadd.xlane.f32.xlu0 %v52
    %v54 = vpop.xlane.xlu0 %53
    %v55 = vsel %vm51, %v44, 0.0
    %56 = vadd.xlane.f32.xlu0 %v55
    %v57 = vpop.xlane.xlu0 %56
    %v58 = vsel %vm51, %v45, 0.0
    %59 = vadd.xlane.f32.xlu0 %v58
    %v60 = vpop.xlane.xlu0 %59
    %v61 = vsel %vm51, %v46, 0.0
    %62 = vadd.xlane.f32.xlu0 %v61
    %v63 = vpop.xlane.xlu0 %62
    %v64 = vsel %vm51, %v47, 0.0
    %65 = vadd.xlane.f32.xlu0 %v64
    %v66 = vpop.xlane.xlu0 %65
    %v67 = vsel %vm51, %v48, 0.0
    %68 = vadd.xlane.f32.xlu0 %v67
    %v69 = vpop.xlane.xlu0 %68
    %v70 = vsel %vm51, %v49, 0.0
    %71 = vadd.xlane.f32.xlu0 %v70
    %v72 = vpop.xlane.xlu0 %71
    %v73 = vsel %vm51, %v50, 0.0
    %74 = vadd.xlane.f32.xlu0 %v73
    %v75 = vpop.xlane.xlu0 %74
    %vm76 = vcmp.gt.f32.partialorder %v54, 0.0
    %vm77 = vcmp.gt.f32.partialorder %v57, 0.0
    %vm78 = vcmp.gt.f32.partialorder %v60, 0.0
    %vm79 = vcmp.gt.f32.partialorder %v63, 0.0
    %vm80 = vcmp.gt.f32.partialorder %v66, 0.0
    %vm81 = vcmp.gt.f32.partialorder %v69, 0.0
    %vm82 = vcmp.gt.f32.partialorder %v72, 0.0
    %vm83 = vcmp.gt.f32.partialorder %v75, 0.0
    %v84 = vrsqrt.pop %v54
    %v85 = vmul.f32 %v84, %v54
    %v86 = vmul.f32 %v85, %v84
    %v87 = vmul.f32 0.5, %v86
    %v88 = vsub.f32 1.5, %v87
    %v89 = vmul.f32 %v84, %v88
    %vm90 = vweird.f32 %v54
    %vm91 = vweird.f32 %v84
    %vm92 = vmor %vm90, %vm91
    %v93 = vsel %vm92, %v84, %v89
    %v94 = vrsqrt.pop %v57
    %v95 = vmul.f32 %v94, %v57
    %v96 = vmul.f32 %v95, %v94
    %v97 = vmul.f32 0.5, %v96
    %v98 = vsub.f32 1.5, %v97
    %v99 = vmul.f32 %v94, %v98
    %vm100 = vweird.f32 %v57
    %vm101 = vweird.f32 %v94
    %vm102 = vmor %vm100, %vm101
    %v103 = vsel %vm102, %v94, %v99
    %v104 = vrsqrt.pop %v60
    %v105 = vmul.f32 %v104, %v60
    %v106 = vmul.f32 %v105, %v104
    %v107 = vmul.f32 0.5, %v106
    %v108 = vsub.f32 1.5, %v107
    %v109 = vmul.f32 %v104, %v108
    %vm110 = vweird.f32 %v60
    %vm111 = vweird.f32 %v104
    %vm112 = vmor %vm110, %vm111
    %v113 = vsel %vm112, %v104, %v109
    %v114 = vrsqrt.pop %v63
    %v115 = vmul.f32 %v114, %v63
    %v116 = vmul.f32 %v115, %v114
    %v117 = vmul.f32 0.5, %v116
    %v118 = vsub.f32 1.5, %v117
    %v119 = vmul.f32 %v114, %v118
    %vm120 = vweird.f32 %v63
    %vm121 = vweird.f32 %v114
    %vm122 = vmor %vm120, %vm121
    %v123 = vsel %vm122, %v114, %v119
    %v124 = vrsqrt.pop %v66
    %v125 = vmul.f32 %v124, %v66
    %v126 = vmul.f32 %v125, %v124
    %v127 = vmul.f32 0.5, %v126
    %v128 = vsub.f32 1.5, %v127
    %v129 = vmul.f32 %v124, %v128
    %vm130 = vweird.f32 %v66
    %vm131 = vweird.f32 %v124
    %vm132 = vmor %vm130, %vm131
    %v133 = vsel %vm132, %v124, %v129
    %v134 = vrsqrt.pop %v69
    %v135 = vmul.f32 %v134, %v69
    %v136 = vmul.f32 %v135, %v134
    %v137 = vmul.f32 0.5, %v136
    %v138 = vsub.f32 1.5, %v137
    %v139 = vmul.f32 %v134, %v138
    %vm140 = vweird.f32 %v69
    %vm141 = vweird.f32 %v134
    %vm142 = vmor %vm140, %vm141
    %v143 = vsel %vm142, %v134, %v139
    %v144 = vrsqrt.pop %v72
    %v145 = vmul.f32 %v144, %v72
    %v146 = vmul.f32 %v145, %v144
    %v147 = vmul.f32 0.5, %v146
    %v148 = vsub.f32 1.5, %v147
    %v149 = vmul.f32 %v144, %v148
    %vm150 = vweird.f32 %v72
    %vm151 = vweird.f32 %v144
    %vm152 = vmor %vm150, %vm151
    %v153 = vsel %vm152, %v144, %v149
    %v154 = vrsqrt.pop %v75
    %v155 = vmul.f32 %v154, %v75
    %v156 = vmul.f32 %v155, %v154
    %v157 = vmul.f32 0.5, %v156
    %v158 = vsub.f32 1.5, %v157
    %v159 = vmul.f32 %v154, %v158
    %vm160 = vweird.f32 %v75
    %vm161 = vweird.f32 %v154
    %vm162 = vmor %vm160, %vm161
    %v163 = vsel %vm162, %v154, %v159
    %v164 = vsel %vm76, %v93, 0.0
    %v165 = vsel %vm77, %v103, 0.0
    %v166 = vsel %vm78, %v113, 0.0
    %v167 = vsel %vm79, %v123, 0.0
    %v168 = vsel %vm80, %v133, 0.0
    %v169 = vsel %vm81, %v143, 0.0
    %v170 = vsel %vm82, %v153, 0.0
    %v171 = vsel %vm83, %v163, 0.0
    %v172 = vpack.c.bf16 %v44, %v43
    %v173 = vpack.c.bf16 %v46, %v45
    %v174 = vpack.c.bf16 %v48, %v47
    %v175 = vpack.c.bf16 %v50, %v49
    %v176 = vld [vmem:[%s1] sm:$0xf]
    %v177 = vld [vmem:[%s1 + $0x4] sm:$0xf]
    %v178 = vld [vmem:[%s1 + $0x8] sm:$0xf]
    %v179 = vld [vmem:[%s1 + $0xc] sm:$0xf]
    %v180 = vld [vmem:[%s1 + $0x10] sm:$0xf]
    %v181 = vld [vmem:[%s1 + $0x14] sm:$0xf]
    %v182 = vld [vmem:[%s1 + $0x18] sm:$0xf]
    %v183 = vld [vmem:[%s1 + $0x1c] sm:$0xf]
    %v184 = vunpack.c.l.bf16 %v176
    %v185 = vunpack.c.l.bf16 %v177
    %v186 = vunpack.c.l.bf16 %v178
    %v187 = vunpack.c.l.bf16 %v179
    %v188 = vunpack.c.l.bf16 %v180
    %v189 = vunpack.c.l.bf16 %v181
    %v190 = vunpack.c.l.bf16 %v182
    %v191 = vunpack.c.l.bf16 %v183
    %v192 = vmul.f32 %v164, %v184
    %v193 = vmul.f32 %v165, %v185
    %v194 = vmul.f32 %v166, %v186
    %v195 = vmul.f32 %v167, %v187
    %v196 = vmul.f32 %v168, %v188
    %v197 = vmul.f32 %v169, %v189
    %v198 = vmul.f32 %v170, %v190
    %v199 = vmul.f32 %v171, %v191
    %v200 = vpack.c.bf16 %v193, %v192
    %v201 = vpack.c.bf16 %v195, %v194
    %v202 = vpack.c.bf16 %v197, %v196
    %v203 = vpack.c.bf16 %v199, %v198
    %v205 = vsel %vm51, %v172, 0
    %v208 = vsel %vm51, %v173, 0
    %v211 = vsel %vm51, %v174, 0
    %v214 = vsel %vm51, %v175, 0
    %216 = vmatpush.bf16.msra.mxu0 0
    %217 = vmatpush.bf16.msra.mxu0 0
    %218 = vmatpush.bf16.msra.mxu0 0
    %219 = vmatpush.bf16.msra.mxu0 0
    %220 = vmatpush.bf16.msra.mxu0 %v203
    %221 = vmatpush.bf16.msra.mxu0 %v202
    %222 = vmatpush.bf16.msra.mxu0 %v201
    %223 = vmatpush.bf16.msra.mxu0 %v200
    %224 = vmatmul.bf16.gmra.mxu0 %v205
    %v225 = vpop.f32.mrf.mxu0
    %v226 = vadd.f32 0.0, %v225
    %v227 = vpop.f32.mrf.mxu0
    %v228 = vadd.f32 0.0, %v227
    %229 = vmatmul.bf16.gmra.mxu0 %v208
    %v230 = vpop.f32.mrf.mxu0
    %v231 = vadd.f32 0.0, %v230
    %v232 = vpop.f32.mrf.mxu0
    %v233 = vadd.f32 0.0, %v232
    %234 = vmatmul.bf16.gmra.mxu0 %v211
    %v235 = vpop.f32.mrf.mxu0
    %v236 = vadd.f32 0.0, %v235
    %v237 = vpop.f32.mrf.mxu0
    %v238 = vadd.f32 0.0, %v237
    %239 = vmatmul.bf16.gmra.mxu0 %v214
    %v240 = vpop.f32.mrf.mxu0
    %v241 = vadd.f32 0.0, %v240
    %v242 = vpop.f32.mrf.mxu0
    %v243 = vadd.f32 0.0, %v242
    %244 = vdwg.mxu0
    %v245 = vmul.f32 %v164, %v226
    %v246 = vmul.f32 %v165, %v228
    %v247 = vmul.f32 %v166, %v231
    %v248 = vmul.f32 %v167, %v233
    %v249 = vmul.f32 %v168, %v236
    %v250 = vmul.f32 %v169, %v238
    %v251 = vmul.f32 %v170, %v241
    %v252 = vmul.f32 %v171, %v243
    %v253 = vpack.c.bf16 %v246, %v245
    %v254 = vpack.c.bf16 %v248, %v247
    %v255 = vpack.c.bf16 %v250, %v249
    %v256 = vpack.c.bf16 %v252, %v251
    %v257 = vld [vmem:[%s2] sm:$0xf]
    %v258 = vld [vmem:[%s2 + $0x4] sm:$0xf]
    %v259 = vld [vmem:[%s2 + $0x8] sm:$0xf]
    %v260 = vld [vmem:[%s2 + $0xc] sm:$0xf]
    %v261 = vld [vmem:[%s3] sm:$0x1]
    %v263 = vperm.slane %v261, 0
    %v269 = vunpack.c.l.b16 %v257
    %v270 = vunpack.c.l.b16 %v258
    %v271 = vunpack.c.l.b16 %v259
    %v272 = vunpack.c.l.b16 %v260
    %v273 = vpack.c.b16 %v270, %v269
    %v274 = vpack.c.b16 %v272, %v271
    %vm277 = vcmask 261120
    %v279 = vsel %vm277, %v253, 0
    %v282 = vsel %vm277, %v254, 0
    %v285 = vsel %vm277, %v255, 0
    %v288 = vsel %vm277, %v256, 0
    %290 = vmatpush.bf16.msra.mxu0 0
    %291 = vmatpush.bf16.msra.mxu0 0
    %292 = vmatpush.bf16.msra.mxu0 0
    %293 = vmatpush.bf16.msra.mxu0 0
    %294 = vmatpush.bf16.msra.mxu0 0
    %295 = vmatpush.bf16.msra.mxu0 0
    %296 = vmatpush.bf16.msra.mxu0 %v274
    %297 = vmatpush.bf16.msra.mxu0 %v273
    %298 = vmatmul.bf16.gmra.mxu0 %v279
    %v299 = vpop.f32.mrf.mxu0
    %v300 = vadd.f32 %v263, %v299
    %v301 = vpop.f32.mrf.mxu0
    %v302 = vadd.f32 %v263, %v301
    %303 = vmatmul.bf16.gmra.mxu0 %v282
    %v304 = vpop.f32.mrf.mxu0
    %v305 = vadd.f32 %v263, %v304
    %v306 = vpop.f32.mrf.mxu0
    %v307 = vadd.f32 %v263, %v306
    %308 = vmatmul.bf16.gmra.mxu0 %v285
    %v309 = vpop.f32.mrf.mxu0
    %v310 = vadd.f32 %v263, %v309
    %v311 = vpop.f32.mrf.mxu0
    %v312 = vadd.f32 %v263, %v311
    %313 = vmatmul.bf16.gmra.mxu0 %v288
    %v314 = vpop.f32.mrf.mxu0
    %v315 = vadd.f32 %v263, %v314
    %v316 = vpop.f32.mrf.mxu0
    %v317 = vadd.f32 %v263, %v316
    %318 = vdwg.mxu0
    %v319 = vmax.f32 %v300, 0.0
    %v320 = vmax.f32 %v302, 0.0
    %v321 = vmax.f32 %v305, 0.0
    %v322 = vmax.f32 %v307, 0.0
    %v323 = vmax.f32 %v310, 0.0
    %v324 = vmax.f32 %v312, 0.0
    %v325 = vmax.f32 %v315, 0.0
    %v326 = vmax.f32 %v317, 0.0
    %v327 = vsel %vm51, %v319, 0.0
    %328 = vadd.xlane.f32.xlu0 %v327
    %v329 = vpop.xlane.xlu0 %328
    %v330 = vsel %vm51, %v320, 0.0
    %331 = vadd.xlane.f32.xlu0 %v330
    %v332 = vpop.xlane.xlu0 %331
    %v333 = vsel %vm51, %v321, 0.0
    %334 = vadd.xlane.f32.xlu0 %v333
    %v335 = vpop.xlane.xlu0 %334
    %v336 = vsel %vm51, %v322, 0.0
    %337 = vadd.xlane.f32.xlu0 %v336
    %v338 = vpop.xlane.xlu0 %337
    %v339 = vsel %vm51, %v323, 0.0
    %340 = vadd.xlane.f32.xlu0 %v339
    %v341 = vpop.xlane.xlu0 %340
    %v342 = vsel %vm51, %v324, 0.0
    %343 = vadd.xlane.f32.xlu0 %v342
    %v344 = vpop.xlane.xlu0 %343
    %v345 = vsel %vm51, %v325, 0.0
    %346 = vadd.xlane.f32.xlu0 %v345
    %v347 = vpop.xlane.xlu0 %346
    %v348 = vsel %vm51, %v326, 0.0
    %349 = vadd.xlane.f32.xlu0 %v348
    %v350 = vpop.xlane.xlu0 %349
    %v351 = vrcp.pop 64.0
    %v352 = vmul.f32 64.0, %v351
    %v353 = vsub.f32 1.0, %v352
    %v354 = vmul.f32 %v351, %v353
    %v355 = vadd.f32 %v351, %v354
    %vm356 = vweird.f32 %v351
    %v357 = vsel %vm356, %v351, %v355
    %v358 = vmul.f32 %v329, %v357
    %v359 = vmul.f32 %v332, %v357
    %v360 = vmul.f32 %v335, %v357
    %v361 = vmul.f32 %v338, %v357
    %v362 = vmul.f32 %v341, %v357
    %v363 = vmul.f32 %v344, %v357
    %v364 = vmul.f32 %v347, %v357
    %v365 = vmul.f32 %v350, %v357
    %v366 = vsub.f32 %v319, %v358
    %v367 = vsub.f32 %v320, %v359
    %v368 = vsub.f32 %v321, %v360
    %v369 = vsub.f32 %v322, %v361
    %v370 = vsub.f32 %v323, %v362
    %v371 = vsub.f32 %v324, %v363
    %v372 = vsub.f32 %v325, %v364
    %v373 = vsub.f32 %v326, %v365
    %v374 = vmul.f32 %v366, %v366
    %v375 = vmul.f32 %v367, %v367
    %v376 = vmul.f32 %v368, %v368
    %v377 = vmul.f32 %v369, %v369
    %v378 = vmul.f32 %v370, %v370
    %v379 = vmul.f32 %v371, %v371
    %v380 = vmul.f32 %v372, %v372
    %v381 = vmul.f32 %v373, %v373
    %v382 = vsel %vm51, %v374, 0.0
    %383 = vadd.xlane.f32.xlu0 %v382
    %v384 = vpop.xlane.xlu0 %383
    %v385 = vsel %vm51, %v375, 0.0
    %386 = vadd.xlane.f32.xlu0 %v385
    %v387 = vpop.xlane.xlu0 %386
    %v388 = vsel %vm51, %v376, 0.0
    %389 = vadd.xlane.f32.xlu0 %v388
    %v390 = vpop.xlane.xlu0 %389
    %v391 = vsel %vm51, %v377, 0.0
    %392 = vadd.xlane.f32.xlu0 %v391
    %v393 = vpop.xlane.xlu0 %392
    %v394 = vsel %vm51, %v378, 0.0
    %395 = vadd.xlane.f32.xlu0 %v394
    %v396 = vpop.xlane.xlu0 %395
    %v397 = vsel %vm51, %v379, 0.0
    %398 = vadd.xlane.f32.xlu0 %v397
    %v399 = vpop.xlane.xlu0 %398
    %v400 = vsel %vm51, %v380, 0.0
    %401 = vadd.xlane.f32.xlu0 %v400
    %v402 = vpop.xlane.xlu0 %401
    %v403 = vsel %vm51, %v381, 0.0
    %404 = vadd.xlane.f32.xlu0 %v403
    %v405 = vpop.xlane.xlu0 %404
    %v406 = vmul.f32 %v384, %v357
    %v407 = vmul.f32 %v387, %v357
    %v408 = vmul.f32 %v390, %v357
    %v409 = vmul.f32 %v393, %v357
    %v410 = vmul.f32 %v396, %v357
    %v411 = vmul.f32 %v399, %v357
    %v412 = vmul.f32 %v402, %v357
    %v413 = vmul.f32 %v405, %v357
    %v414 = vadd.f32 %v406, 1e-05
    %v415 = vadd.f32 %v407, 1e-05
    %v416 = vadd.f32 %v408, 1e-05
    %v417 = vadd.f32 %v409, 1e-05
    %v418 = vadd.f32 %v410, 1e-05
    %v419 = vadd.f32 %v411, 1e-05
    %v420 = vadd.f32 %v412, 1e-05
    %v421 = vadd.f32 %v413, 1e-05
    %v422 = vrsqrt.pop %v414
    %v423 = vmul.f32 %v422, %v414
    %v424 = vmul.f32 %v423, %v422
    %v425 = vmul.f32 0.5, %v424
    %v426 = vsub.f32 1.5, %v425
    %v427 = vmul.f32 %v422, %v426
    %vm428 = vweird.f32 %v414
    %vm429 = vweird.f32 %v422
    %vm430 = vmor %vm428, %vm429
    %v431 = vsel %vm430, %v422, %v427
    %v432 = vrsqrt.pop %v415
    %v433 = vmul.f32 %v432, %v415
    %v434 = vmul.f32 %v433, %v432
    %v435 = vmul.f32 0.5, %v434
    %v436 = vsub.f32 1.5, %v435
    %v437 = vmul.f32 %v432, %v436
    %vm438 = vweird.f32 %v415
    %vm439 = vweird.f32 %v432
    %vm440 = vmor %vm438, %vm439
    %v441 = vsel %vm440, %v432, %v437
    %v442 = vrsqrt.pop %v416
    %v443 = vmul.f32 %v442, %v416
    %v444 = vmul.f32 %v443, %v442
    %v445 = vmul.f32 0.5, %v444
    %v446 = vsub.f32 1.5, %v445
    %v447 = vmul.f32 %v442, %v446
    %vm448 = vweird.f32 %v416
    %vm449 = vweird.f32 %v442
    %vm450 = vmor %vm448, %vm449
    %v451 = vsel %vm450, %v442, %v447
    %v452 = vrsqrt.pop %v417
    %v453 = vmul.f32 %v452, %v417
    %v454 = vmul.f32 %v453, %v452
    %v455 = vmul.f32 0.5, %v454
    %v456 = vsub.f32 1.5, %v455
    %v457 = vmul.f32 %v452, %v456
    %vm458 = vweird.f32 %v417
    %vm459 = vweird.f32 %v452
    %vm460 = vmor %vm458, %vm459
    %v461 = vsel %vm460, %v452, %v457
    %v462 = vrsqrt.pop %v418
    %v463 = vmul.f32 %v462, %v418
    %v464 = vmul.f32 %v463, %v462
    %v465 = vmul.f32 0.5, %v464
    %v466 = vsub.f32 1.5, %v465
    %v467 = vmul.f32 %v462, %v466
    %vm468 = vweird.f32 %v418
    %vm469 = vweird.f32 %v462
    %vm470 = vmor %vm468, %vm469
    %v471 = vsel %vm470, %v462, %v467
    %v472 = vrsqrt.pop %v419
    %v473 = vmul.f32 %v472, %v419
    %v474 = vmul.f32 %v473, %v472
    %v475 = vmul.f32 0.5, %v474
    %v476 = vsub.f32 1.5, %v475
    %v477 = vmul.f32 %v472, %v476
    %vm478 = vweird.f32 %v419
    %vm479 = vweird.f32 %v472
    %vm480 = vmor %vm478, %vm479
    %v481 = vsel %vm480, %v472, %v477
    %v482 = vrsqrt.pop %v420
    %v483 = vmul.f32 %v482, %v420
    %v484 = vmul.f32 %v483, %v482
    %v485 = vmul.f32 0.5, %v484
    %v486 = vsub.f32 1.5, %v485
    %v487 = vmul.f32 %v482, %v486
    %vm488 = vweird.f32 %v420
    %vm489 = vweird.f32 %v482
    %vm490 = vmor %vm488, %vm489
    %v491 = vsel %vm490, %v482, %v487
    %v492 = vrsqrt.pop %v421
    %v493 = vmul.f32 %v492, %v421
    %v494 = vmul.f32 %v493, %v492
    %v495 = vmul.f32 0.5, %v494
    %v496 = vsub.f32 1.5, %v495
    %v497 = vmul.f32 %v492, %v496
    %vm498 = vweird.f32 %v421
    %vm499 = vweird.f32 %v492
    %vm500 = vmor %vm498, %vm499
    %v501 = vsel %vm500, %v492, %v497
    %v502 = vmul.f32 %v366, %v431
    %v503 = vmul.f32 %v367, %v441
    %v504 = vmul.f32 %v368, %v451
    %v505 = vmul.f32 %v369, %v461
    %v506 = vmul.f32 %v370, %v471
    %v507 = vmul.f32 %v371, %v481
    %v508 = vmul.f32 %v372, %v491
    %v509 = vmul.f32 %v373, %v501
    %v510 = vld [vmem:[%s4] sm:$0x1]
    %v512 = vperm.slane %v510, 0
    %v514 = vmul.f32 %v502, %v512
    %v515 = vmul.f32 %v503, %v512
    %v516 = vmul.f32 %v504, %v512
    %v517 = vmul.f32 %v505, %v512
    %v518 = vmul.f32 %v506, %v512
    %v519 = vmul.f32 %v507, %v512
    %v520 = vmul.f32 %v508, %v512
    %v521 = vmul.f32 %v509, %v512
    %v522 = vld [vmem:[%s5] sm:$0x1]
    %v524 = vperm.slane %v522, 0
    %v526 = vadd.f32 %v514, %v524
    %v527 = vadd.f32 %v515, %v524
    %v528 = vadd.f32 %v516, %v524
    %v529 = vadd.f32 %v517, %v524
    %v530 = vadd.f32 %v518, %v524
    %v531 = vadd.f32 %v519, %v524
    %v532 = vadd.f32 %v520, %v524
    %v533 = vadd.f32 %v521, %v524
    %v534 = vpack.c.bf16 %v527, %v526
    %v535 = vpack.c.bf16 %v529, %v528
    %v536 = vpack.c.bf16 %v531, %v530
    %v537 = vpack.c.bf16 %v533, %v532
    %v538 = vld [vmem:[%s6] sm:$0xf]
    %v539 = vld [vmem:[%s6 + $0x4] sm:$0xf]
    %v540 = vld [vmem:[%s6 + $0x8] sm:$0xf]
    %v541 = vld [vmem:[%s6 + $0xc] sm:$0xf]
    %v542 = vld [vmem:[%s6 + $0x10] sm:$0xf]
    %v543 = vld [vmem:[%s6 + $0x14] sm:$0xf]
    %v544 = vld [vmem:[%s6 + $0x18] sm:$0xf]
    %v545 = vld [vmem:[%s6 + $0x1c] sm:$0xf]
    %v554 = vunpack.c.l.b16 %v538
    %v555 = vunpack.c.l.b16 %v539
    %v556 = vunpack.c.l.b16 %v540
    %v557 = vunpack.c.l.b16 %v541
    %v558 = vunpack.c.l.b16 %v542
    %v559 = vunpack.c.l.b16 %v543
    %v560 = vunpack.c.l.b16 %v544
    %v561 = vunpack.c.l.b16 %v545
    %v562 = vpack.c.b16 %v555, %v554
    %v563 = vpack.c.b16 %v557, %v556
    %v564 = vpack.c.b16 %v559, %v558
    %v565 = vpack.c.b16 %v561, %v560
    %v571 = vsel %vm51, %v534, 0
    %v574 = vsel %vm51, %v535, 0
    %v577 = vsel %vm51, %v536, 0
    %v580 = vsel %vm51, %v537, 0
    %582 = vmatpush.bf16.msra.mxu0 0
    %583 = vmatpush.bf16.msra.mxu0 0
    %584 = vmatpush.bf16.msra.mxu0 0
    %585 = vmatpush.bf16.msra.mxu0 0
    %586 = vmatpush.bf16.msra.mxu0 %v565
    %587 = vmatpush.bf16.msra.mxu0 %v564
    %588 = vmatpush.bf16.msra.mxu0 %v563
    %589 = vmatpush.bf16.msra.mxu0 %v562
    %590 = vmatmul.bf16.gmra.mxu0 %v571
    %v591 = vpop.f32.mrf.mxu0
    %v592 = vadd.f32 0.0, %v591
    %v593 = vpop.f32.mrf.mxu0
    %v594 = vadd.f32 0.0, %v593
    %595 = vmatmul.bf16.gmra.mxu0 %v574
    %v596 = vpop.f32.mrf.mxu0
    %v597 = vadd.f32 0.0, %v596
    %v598 = vpop.f32.mrf.mxu0
    %v599 = vadd.f32 0.0, %v598
    %600 = vmatmul.bf16.gmra.mxu0 %v577
    %v601 = vpop.f32.mrf.mxu0
    %v602 = vadd.f32 0.0, %v601
    %v603 = vpop.f32.mrf.mxu0
    %v604 = vadd.f32 0.0, %v603
    %605 = vmatmul.bf16.gmra.mxu0 %v580
    %v606 = vpop.f32.mrf.mxu0
    %v607 = vadd.f32 0.0, %v606
    %v608 = vpop.f32.mrf.mxu0
    %v609 = vadd.f32 0.0, %v608
    %610 = vdwg.mxu0
    %v611 = vmul.f32 %v164, %v592
    %v612 = vmul.f32 %v165, %v594
    %v613 = vmul.f32 %v166, %v597
    %v614 = vmul.f32 %v167, %v599
    %v615 = vmul.f32 %v168, %v602
    %v616 = vmul.f32 %v169, %v604
    %v617 = vmul.f32 %v170, %v607
    %v618 = vmul.f32 %v171, %v609
    %v619 = vpack.c.bf16 %v612, %v611
    %v620 = vpack.c.bf16 %v614, %v613
    %v621 = vpack.c.bf16 %v616, %v615
    %v622 = vpack.c.bf16 %v618, %v617
    %623 = vmatpush.bf16.msra.mxu0 0
    %624 = vmatpush.bf16.msra.mxu0 0
    %625 = vmatpush.bf16.msra.mxu0 0
    %626 = vmatpush.bf16.msra.mxu0 0
    %627 = vmatpush.bf16.msra.mxu0 %v622
    %628 = vmatpush.bf16.msra.mxu0 %v621
    %629 = vmatpush.bf16.msra.mxu0 %v620
    %630 = vmatpush.bf16.msra.mxu0 %v619
    %631 = vmatmul.bf16.gmra.mxu0 %v205
    %v632 = vpop.f32.mrf.mxu0
    %v633 = vadd.f32 0.0, %v632
    %v634 = vpop.f32.mrf.mxu0
    %v635 = vadd.f32 0.0, %v634
    %636 = vmatmul.bf16.gmra.mxu0 %v208
    %v637 = vpop.f32.mrf.mxu0
    %v638 = vadd.f32 0.0, %v637
    %v639 = vpop.f32.mrf.mxu0
    %v640 = vadd.f32 0.0, %v639
    %641 = vmatmul.bf16.gmra.mxu0 %v211
    %v642 = vpop.f32.mrf.mxu0
    %v643 = vadd.f32 0.0, %v642
    %v644 = vpop.f32.mrf.mxu0
    %v645 = vadd.f32 0.0, %v644
    %646 = vmatmul.bf16.gmra.mxu0 %v214
    %v647 = vpop.f32.mrf.mxu0
    %v648 = vadd.f32 0.0, %v647
    %v649 = vpop.f32.mrf.mxu0
    %v650 = vadd.f32 0.0, %v649
    %651 = vdwg.mxu0
    %v652 = vmul.f32 %v164, %v633
    %v653 = vmul.f32 %v165, %v635
    %v654 = vmul.f32 %v166, %v638
    %v655 = vmul.f32 %v167, %v640
    %v656 = vmul.f32 %v168, %v643
    %v657 = vmul.f32 %v169, %v645
    %v658 = vmul.f32 %v170, %v648
    %v659 = vmul.f32 %v171, %v650
    %v660 = vld [vmem:[%s7] sm:$0x1]
    %v662 = vperm.slane %v660, 0
    %v664 = vadd.f32 %v652, %v662
    %v665 = vadd.f32 %v653, %v662
    %v666 = vadd.f32 %v654, %v662
    %v667 = vadd.f32 %v655, %v662
    %v668 = vadd.f32 %v656, %v662
    %v669 = vadd.f32 %v657, %v662
    %v670 = vadd.f32 %v658, %v662
    %v671 = vadd.f32 %v659, %v662
    %v672 = vmax.f32 %v664, 0.0
    %v673 = vmax.f32 %v665, 0.0
    %v674 = vmax.f32 %v666, 0.0
    %v675 = vmax.f32 %v667, 0.0
    %v676 = vmax.f32 %v668, 0.0
    %v677 = vmax.f32 %v669, 0.0
    %v678 = vmax.f32 %v670, 0.0
    %v679 = vmax.f32 %v671, 0.0
    %v680 = vsel %vm277, %v672, 0.0
    %681 = vadd.xlane.f32.xlu0 %v680
    %v682 = vpop.xlane.xlu0 %681
    %v683 = vsel %vm277, %v673, 0.0
    %684 = vadd.xlane.f32.xlu0 %v683
    %v685 = vpop.xlane.xlu0 %684
    %v686 = vsel %vm277, %v674, 0.0
    %687 = vadd.xlane.f32.xlu0 %v686
    %v688 = vpop.xlane.xlu0 %687
    %v689 = vsel %vm277, %v675, 0.0
    %690 = vadd.xlane.f32.xlu0 %v689
    %v691 = vpop.xlane.xlu0 %690
    %v692 = vsel %vm277, %v676, 0.0
    %693 = vadd.xlane.f32.xlu0 %v692
    %v694 = vpop.xlane.xlu0 %693
    %v695 = vsel %vm277, %v677, 0.0
    %696 = vadd.xlane.f32.xlu0 %v695
    %v697 = vpop.xlane.xlu0 %696
    %v698 = vsel %vm277, %v678, 0.0
    %699 = vadd.xlane.f32.xlu0 %v698
    %v700 = vpop.xlane.xlu0 %699
    %v701 = vsel %vm277, %v679, 0.0
    %702 = vadd.xlane.f32.xlu0 %v701
    %v703 = vpop.xlane.xlu0 %702
    %v704 = vrcp.pop 32.0
    %v705 = vmul.f32 32.0, %v704
    %v706 = vsub.f32 1.0, %v705
    %v707 = vmul.f32 %v704, %v706
    %v708 = vadd.f32 %v704, %v707
    %vm709 = vweird.f32 %v704
    %v710 = vsel %vm709, %v704, %v708
    %v711 = vmul.f32 %v682, %v710
    %v712 = vmul.f32 %v685, %v710
    %v713 = vmul.f32 %v688, %v710
    %v714 = vmul.f32 %v691, %v710
    %v715 = vmul.f32 %v694, %v710
    %v716 = vmul.f32 %v697, %v710
    %v717 = vmul.f32 %v700, %v710
    %v718 = vmul.f32 %v703, %v710
    %v719 = vsub.f32 %v672, %v711
    %v720 = vsub.f32 %v673, %v712
    %v721 = vsub.f32 %v674, %v713
    %v722 = vsub.f32 %v675, %v714
    %v723 = vsub.f32 %v676, %v715
    %v724 = vsub.f32 %v677, %v716
    %v725 = vsub.f32 %v678, %v717
    %v726 = vsub.f32 %v679, %v718
    %v727 = vmul.f32 %v719, %v719
    %v728 = vmul.f32 %v720, %v720
    %v729 = vmul.f32 %v721, %v721
    %v730 = vmul.f32 %v722, %v722
    %v731 = vmul.f32 %v723, %v723
    %v732 = vmul.f32 %v724, %v724
    %v733 = vmul.f32 %v725, %v725
    %v734 = vmul.f32 %v726, %v726
    %v735 = vsel %vm277, %v727, 0.0
    %736 = vadd.xlane.f32.xlu0 %v735
    %v737 = vpop.xlane.xlu0 %736
    %v738 = vsel %vm277, %v728, 0.0
    %739 = vadd.xlane.f32.xlu0 %v738
    %v740 = vpop.xlane.xlu0 %739
    %v741 = vsel %vm277, %v729, 0.0
    %742 = vadd.xlane.f32.xlu0 %v741
    %v743 = vpop.xlane.xlu0 %742
    %v744 = vsel %vm277, %v730, 0.0
    %745 = vadd.xlane.f32.xlu0 %v744
    %v746 = vpop.xlane.xlu0 %745
    %v747 = vsel %vm277, %v731, 0.0
    %748 = vadd.xlane.f32.xlu0 %v747
    %v749 = vpop.xlane.xlu0 %748
    %v750 = vsel %vm277, %v732, 0.0
    %751 = vadd.xlane.f32.xlu0 %v750
    %v752 = vpop.xlane.xlu0 %751
    %v753 = vsel %vm277, %v733, 0.0
    %754 = vadd.xlane.f32.xlu0 %v753
    %v755 = vpop.xlane.xlu0 %754
    %v756 = vsel %vm277, %v734, 0.0
    %757 = vadd.xlane.f32.xlu0 %v756
    %v758 = vpop.xlane.xlu0 %757
    %v759 = vmul.f32 %v737, %v710
    %v760 = vmul.f32 %v740, %v710
    %v761 = vmul.f32 %v743, %v710
    %v762 = vmul.f32 %v746, %v710
    %v763 = vmul.f32 %v749, %v710
    %v764 = vmul.f32 %v752, %v710
    %v765 = vmul.f32 %v755, %v710
    %v766 = vmul.f32 %v758, %v710
    %v767 = vadd.f32 %v759, 1e-05
    %v768 = vadd.f32 %v760, 1e-05
    %v769 = vadd.f32 %v761, 1e-05
    %v770 = vadd.f32 %v762, 1e-05
    %v771 = vadd.f32 %v763, 1e-05
    %v772 = vadd.f32 %v764, 1e-05
    %v773 = vadd.f32 %v765, 1e-05
    %v774 = vadd.f32 %v766, 1e-05
    %v775 = vrsqrt.pop %v767
    %v776 = vmul.f32 %v775, %v767
    %v777 = vmul.f32 %v776, %v775
    %v778 = vmul.f32 0.5, %v777
    %v779 = vsub.f32 1.5, %v778
    %v780 = vmul.f32 %v775, %v779
    %vm781 = vweird.f32 %v767
    %vm782 = vweird.f32 %v775
    %vm783 = vmor %vm781, %vm782
    %v784 = vsel %vm783, %v775, %v780
    %v785 = vrsqrt.pop %v768
    %v786 = vmul.f32 %v785, %v768
    %v787 = vmul.f32 %v786, %v785
    %v788 = vmul.f32 0.5, %v787
    %v789 = vsub.f32 1.5, %v788
    %v790 = vmul.f32 %v785, %v789
    %vm791 = vweird.f32 %v768
    %vm792 = vweird.f32 %v785
    %vm793 = vmor %vm791, %vm792
    %v794 = vsel %vm793, %v785, %v790
    %v795 = vrsqrt.pop %v769
    %v796 = vmul.f32 %v795, %v769
    %v797 = vmul.f32 %v796, %v795
    %v798 = vmul.f32 0.5, %v797
    %v799 = vsub.f32 1.5, %v798
    %v800 = vmul.f32 %v795, %v799
    %vm801 = vweird.f32 %v769
    %vm802 = vweird.f32 %v795
    %vm803 = vmor %vm801, %vm802
    %v804 = vsel %vm803, %v795, %v800
    %v805 = vrsqrt.pop %v770
    %v806 = vmul.f32 %v805, %v770
    %v807 = vmul.f32 %v806, %v805
    %v808 = vmul.f32 0.5, %v807
    %v809 = vsub.f32 1.5, %v808
    %v810 = vmul.f32 %v805, %v809
    %vm811 = vweird.f32 %v770
    %vm812 = vweird.f32 %v805
    %vm813 = vmor %vm811, %vm812
    %v814 = vsel %vm813, %v805, %v810
    %v815 = vrsqrt.pop %v771
    %v816 = vmul.f32 %v815, %v771
    %v817 = vmul.f32 %v816, %v815
    %v818 = vmul.f32 0.5, %v817
    %v819 = vsub.f32 1.5, %v818
    %v820 = vmul.f32 %v815, %v819
    %vm821 = vweird.f32 %v771
    %vm822 = vweird.f32 %v815
    %vm823 = vmor %vm821, %vm822
    %v824 = vsel %vm823, %v815, %v820
    %v825 = vrsqrt.pop %v772
    %v826 = vmul.f32 %v825, %v772
    %v827 = vmul.f32 %v826, %v825
    %v828 = vmul.f32 0.5, %v827
    %v829 = vsub.f32 1.5, %v828
    %v830 = vmul.f32 %v825, %v829
    %vm831 = vweird.f32 %v772
    %vm832 = vweird.f32 %v825
    %vm833 = vmor %vm831, %vm832
    %v834 = vsel %vm833, %v825, %v830
    %v835 = vrsqrt.pop %v773
    %v836 = vmul.f32 %v835, %v773
    %v837 = vmul.f32 %v836, %v835
    %v838 = vmul.f32 0.5, %v837
    %v839 = vsub.f32 1.5, %v838
    %v840 = vmul.f32 %v835, %v839
    %vm841 = vweird.f32 %v773
    %vm842 = vweird.f32 %v835
    %vm843 = vmor %vm841, %vm842
    %v844 = vsel %vm843, %v835, %v840
    %v845 = vrsqrt.pop %v774
    %v846 = vmul.f32 %v845, %v774
    %v847 = vmul.f32 %v846, %v845
    %v848 = vmul.f32 0.5, %v847
    %v849 = vsub.f32 1.5, %v848
    %v850 = vmul.f32 %v845, %v849
    %vm851 = vweird.f32 %v774
    %vm852 = vweird.f32 %v845
    %vm853 = vmor %vm851, %vm852
    %v854 = vsel %vm853, %v845, %v850
    %v855 = vmul.f32 %v719, %v784
    %v856 = vmul.f32 %v720, %v794
    %v857 = vmul.f32 %v721, %v804
    %v858 = vmul.f32 %v722, %v814
    %v859 = vmul.f32 %v723, %v824
    %v860 = vmul.f32 %v724, %v834
    %v861 = vmul.f32 %v725, %v844
    %v862 = vmul.f32 %v726, %v854
    %v863 = vld [vmem:[%s8] sm:$0x1]
    %v865 = vperm.slane %v863, 0
    %v867 = vmul.f32 %v855, %v865
    %v868 = vmul.f32 %v856, %v865
    %v869 = vmul.f32 %v857, %v865
    %v870 = vmul.f32 %v858, %v865
    %v871 = vmul.f32 %v859, %v865
    %v872 = vmul.f32 %v860, %v865
    %v873 = vmul.f32 %v861, %v865
    %v874 = vmul.f32 %v862, %v865
    %v875 = vld [vmem:[%s9] sm:$0x1]
    %v877 = vperm.slane %v875, 0
    %v879 = vadd.f32 %v867, %v877
    %v880 = vadd.f32 %v868, %v877
    %v881 = vadd.f32 %v869, %v877
    %v882 = vadd.f32 %v870, %v877
    %v883 = vadd.f32 %v871, %v877
    %v884 = vadd.f32 %v872, %v877
    %v885 = vadd.f32 %v873, %v877
    %v886 = vadd.f32 %v874, %v877
    %v887 = vpack.c.bf16 %v880, %v879
    %v888 = vpack.c.bf16 %v882, %v881
    %v889 = vpack.c.bf16 %v884, %v883
    %v890 = vpack.c.bf16 %v886, %v885
    %v891 = vld [vmem:[%s10] sm:$0xf]
    %v892 = vld [vmem:[%s10 + $0x4] sm:$0xf]
    %v893 = vld [vmem:[%s10 + $0x8] sm:$0xf]
    %v894 = vld [vmem:[%s10 + $0xc] sm:$0xf]
    %v899 = vunpack.c.l.b16 %v891
    %v900 = vunpack.c.l.b16 %v892
    %v901 = vunpack.c.l.b16 %v893
    %v902 = vunpack.c.l.b16 %v894
    %v903 = vpack.c.b16 %v900, %v899
    %v904 = vpack.c.b16 %v902, %v901
    %v908 = vsel %vm277, %v887, 0
    %v911 = vsel %vm277, %v888, 0
    %v914 = vsel %vm277, %v889, 0
    %v917 = vsel %vm277, %v890, 0
    %919 = vmatpush.bf16.msra.mxu0 0
    %920 = vmatpush.bf16.msra.mxu0 0
    %921 = vmatpush.bf16.msra.mxu0 0
    %922 = vmatpush.bf16.msra.mxu0 0
    %923 = vmatpush.bf16.msra.mxu0 0
    %924 = vmatpush.bf16.msra.mxu0 0
    %925 = vmatpush.bf16.msra.mxu0 %v904
    %926 = vmatpush.bf16.msra.mxu0 %v903
    %927 = vmatmul.bf16.gmra.mxu0 %v908
    %v928 = vpop.f32.mrf.mxu0
    %v929 = vadd.f32 0.0, %v928
    %v930 = vpop.f32.mrf.mxu0
    %v931 = vadd.f32 0.0, %v930
    %932 = vmatmul.bf16.gmra.mxu0 %v911
    %v933 = vpop.f32.mrf.mxu0
    %v934 = vadd.f32 0.0, %v933
    %v935 = vpop.f32.mrf.mxu0
    %v936 = vadd.f32 0.0, %v935
    %937 = vmatmul.bf16.gmra.mxu0 %v914
    %v938 = vpop.f32.mrf.mxu0
    %v939 = vadd.f32 0.0, %v938
    %v940 = vpop.f32.mrf.mxu0
    %v941 = vadd.f32 0.0, %v940
    %942 = vmatmul.bf16.gmra.mxu0 %v917
    %v943 = vpop.f32.mrf.mxu0
    %v944 = vadd.f32 0.0, %v943
    %v945 = vpop.f32.mrf.mxu0
    %v946 = vadd.f32 0.0, %v945
    %947 = vdwg.mxu0
    %v948 = vmul.f32 %v164, %v929
    %v949 = vmul.f32 %v165, %v931
    %v950 = vmul.f32 %v166, %v934
    %v951 = vmul.f32 %v167, %v936
    %v952 = vmul.f32 %v168, %v939
    %v953 = vmul.f32 %v169, %v941
    %v954 = vmul.f32 %v170, %v944
    %v955 = vmul.f32 %v171, %v946
    %v956 = vpack.c.bf16 %v949, %v948
    %v957 = vpack.c.bf16 %v951, %v950
    %v958 = vpack.c.bf16 %v953, %v952
    %v959 = vpack.c.bf16 %v955, %v954
    %960 = vmatpush.bf16.msra.mxu0 0
    %961 = vmatpush.bf16.msra.mxu0 0
    %962 = vmatpush.bf16.msra.mxu0 0
    %963 = vmatpush.bf16.msra.mxu0 0
    %964 = vmatpush.bf16.msra.mxu0 %v959
    %965 = vmatpush.bf16.msra.mxu0 %v958
    %966 = vmatpush.bf16.msra.mxu0 %v957
    %967 = vmatpush.bf16.msra.mxu0 %v956
    %968 = vmatmul.bf16.gmra.mxu0 %v205
    %v969 = vpop.f32.mrf.mxu0
    %v970 = vadd.f32 0.0, %v969
    %v971 = vpop.f32.mrf.mxu0
    %v972 = vadd.f32 0.0, %v971
    %973 = vmatmul.bf16.gmra.mxu0 %v208
    %v974 = vpop.f32.mrf.mxu0
    %v975 = vadd.f32 0.0, %v974
    %v976 = vpop.f32.mrf.mxu0
    %v977 = vadd.f32 0.0, %v976
    %978 = vmatmul.bf16.gmra.mxu0 %v211
    %v979 = vpop.f32.mrf.mxu0
    %v980 = vadd.f32 0.0, %v979
    %v981 = vpop.f32.mrf.mxu0
    %v982 = vadd.f32 0.0, %v981
    %983 = vmatmul.bf16.gmra.mxu0 %v214
    %v984 = vpop.f32.mrf.mxu0
    %v985 = vadd.f32 0.0, %v984
    %v986 = vpop.f32.mrf.mxu0
    %v987 = vadd.f32 0.0, %v986
    %988 = vdwg.mxu0
    %v989 = vmul.f32 %v164, %v970
    %v990 = vmul.f32 %v165, %v972
    %v991 = vmul.f32 %v166, %v975
    %v992 = vmul.f32 %v167, %v977
    %v993 = vmul.f32 %v168, %v980
    %v994 = vmul.f32 %v169, %v982
    %v995 = vmul.f32 %v170, %v985
    %v996 = vmul.f32 %v171, %v987
    %v997 = vld [vmem:[%s11] sm:$0x1]
    %v999 = vperm.slane %v997, 0
    %v1001 = vadd.f32 %v989, %v999
    %v1002 = vadd.f32 %v990, %v999
    %v1003 = vadd.f32 %v991, %v999
    %v1004 = vadd.f32 %v992, %v999
    %v1005 = vadd.f32 %v993, %v999
    %v1006 = vadd.f32 %v994, %v999
    %v1007 = vadd.f32 %v995, %v999
    %v1008 = vadd.f32 %v996, %v999
    %v1009 = vpack.c.bf16 %v1002, %v1001
    %v1010 = vpack.c.bf16 %v1004, %v1003
    %v1011 = vpack.c.bf16 %v1006, %v1005
    %v1012 = vpack.c.bf16 %v1008, %v1007
    %vm1013 = vcmask 130048
    %v1015 = vsel %vm1013, %v1009, 0
    %v1018 = vsel %vm1013, %v1010, 0
    %v1021 = vsel %vm1013, %v1011, 0
    %v1024 = vsel %vm1013, %v1012, 0
    %1026 = vmatpush.bf16.xpose.msra.mxu0 0
    %1027 = vmatpush.bf16.xpose.msra.mxu0 0
    %1028 = vmatpush.bf16.xpose.msra.mxu0 0
    %1029 = vmatpush.bf16.xpose.msra.mxu0 0
    %1030 = vmatpush.bf16.xpose.msra.mxu0 %v1024
    %1031 = vmatpush.bf16.xpose.msra.mxu0 %v1021
    %1032 = vmatpush.bf16.xpose.msra.mxu0 %v1018
    %1033 = vmatpush.bf16.xpose.msra.mxu0 %v1015
    %1034 = vmatmul.bf16.gmra.mxu0 %v1015
    %v1035 = vpop.f32.mrf.mxu0
    %v1036 = vadd.f32 0.0, %v1035
    %v1037 = vpop.f32.mrf.mxu0
    %v1038 = vadd.f32 0.0, %v1037
    %1039 = vmatmul.bf16.gmra.mxu0 %v1018
    %v1040 = vpop.f32.mrf.mxu0
    %v1041 = vadd.f32 0.0, %v1040
    %v1042 = vpop.f32.mrf.mxu0
    %v1043 = vadd.f32 0.0, %v1042
    %1044 = vmatmul.bf16.gmra.mxu0 %v1021
    %v1045 = vpop.f32.mrf.mxu0
    %v1046 = vadd.f32 0.0, %v1045
    %v1047 = vpop.f32.mrf.mxu0
    %v1048 = vadd.f32 0.0, %v1047
    %1049 = vmatmul.bf16.gmra.mxu0 %v1024
    %v1050 = vpop.f32.mrf.mxu0
    %v1051 = vadd.f32 0.0, %v1050
    %v1052 = vpop.f32.mrf.mxu0
    %v1053 = vadd.f32 0.0, %v1052
    %1054 = vdwg.mxu0
    %1063 = vrot.lane.b32.xlu0 %v1001, 64
    %v1064 = vpop.permute.xlu0 %1063
    %1065 = vrot.lane.b32.xlu0 %v1002, 64
    %v1066 = vpop.permute.xlu0 %1065
    %1067 = vrot.lane.b32.xlu0 %v1003, 64
    %v1068 = vpop.permute.xlu0 %1067
    %1069 = vrot.lane.b32.xlu0 %v1004, 64
    %v1070 = vpop.permute.xlu0 %1069
    %1071 = vrot.lane.b32.xlu0 %v1005, 64
    %v1072 = vpop.permute.xlu0 %1071
    %1073 = vrot.lane.b32.xlu0 %v1006, 64
    %v1074 = vpop.permute.xlu0 %1073
    %1075 = vrot.lane.b32.xlu0 %v1007, 64
    %v1076 = vpop.permute.xlu0 %1075
    %1077 = vrot.lane.b32.xlu0 %v1008, 64
    %v1078 = vpop.permute.xlu0 %1077
    %v1087 = vsel %vm51, %v1036, %v1064
    %v1088 = vsel %vm51, %v1038, %v1066
    %v1089 = vsel %vm51, %v1041, %v1068
    %v1090 = vsel %vm51, %v1043, %v1070
    %v1091 = vsel %vm51, %v1046, %v1072
    %v1092 = vsel %vm51, %v1048, %v1074
    %v1093 = vsel %vm51, %v1051, %v1076
    %v1094 = vsel %vm51, %v1053, %v1078
    %vm1095 = vcmask 785408
    %v1096 = vsel %vm1095, %v1087, 0.0
    %v1097 = vsel %vm1095, %v1088, 0.0
    %v1098 = vsel %vm1095, %v1089, 0.0
    %v1099 = vsel %vm1095, %v1090, 0.0
    %v1100 = vsel %vm1095, %v1091, 0.0
    %v1101 = vsel %vm1095, %v1092, 0.0
    %v1102 = vsel %vm1095, %v1093, 0.0
    %v1103 = vsel %vm1095, %v1094, 0.0
    %1104 = vst [vmem:[#allocation2] sm:$0xff] %v1096
    %1105 = vst [vmem:[#allocation2 + $0x8] sm:$0xff] %v1097
    %1106 = vst [vmem:[#allocation2 + $0x10] sm:$0xff] %v1098
    %1107 = vst [vmem:[#allocation2 + $0x18] sm:$0xff] %v1099
    %1108 = vst [vmem:[#allocation2 + $0x20] sm:$0xff] %v1100
    %1109 = vst [vmem:[#allocation2 + $0x28] sm:$0xff] %v1101
    %1110 = vst [vmem:[#allocation2 + $0x30] sm:$0xff] %v1102
    %1111 = vst [vmem:[#allocation2 + $0x38] sm:$0xff] %v1103
    // Predicated region
    $region50: #{tpu_custom_call.1} parent=1 // pred_check
      _
    $region51: #{tpu_custom_call.1} parent=1 // pred_check_branch
      %1113 = sbr.rel (0) target = $region53
    $region52: #{tpu_custom_call.1} parent=1 // pred_region
      %1115 = vsyncadd [#allocation3], 0
      %s1116 = sshll.u32 [#allocation2], 4
      %s1117 = int_to_ptr.vmem [resolvable:$true] %s1116
      %s1118 = sshll.u32 %s12, 4
      %s1119 = int_to_ptr.hbm [resolvable:$true] %s1118
      %1124 = dma.vmem_to_hbm [thread:$0]  %s1117, 1024, %s1119, [#allocation3], 128, 128, 8
    $region53: #{tpu_custom_call.1} parent=1 // pred_fallthru
      _
    // Predicated region
    $region54: #{tpu_custom_call.1} parent=1 // pred_check
      _
    $region55: #{tpu_custom_call.1} parent=1 // pred_check_branch
      %1126 = sbr.rel (0) target = $region57
    $region56: #{tpu_custom_call.1} parent=1 // pred_region
      %1128 = dma.done [#allocation3], 1024
    $region57: #{tpu_custom_call.1} parent=1 // pred_fallthru
      _
    %1129 = vsyncpa [#allocation3], 1

</llo_original>
